<compile_context>
chip_gen: v7x
topology: tpu7x:2x2x1
jax: 0.10.0
libtpu: 0.0.40
codegen_flags: <defaults>
</compile_context>

<pallas_src>
import jax
import jax.numpy as jnp
from jax.experimental import pallas as pl
from jax.experimental.pallas import tpu as pltpu

# ---- hyperparameters mirroring the PyTorch module's globals / __init__ ----
BATCH_SIZE = 1          # `batch_size` global in the reference code
NUM_STEPS = 5           # `num_steps` global in the reference code
N_CHARACTERS = 16       # vocab size -> input_size == output_size
HIDDEN_SIZE = 32        # hidden_size
N_LAYERS = 1            # n_layers

GATE_W = 4 * HIDDEN_SIZE                          # 128 == lane width
SLAB_W = 128                                      # lane width of packed slabs / output
V_PAD = SLAB_W                                    # decoder logits padded to 128 lanes
OUT_ROWS = max(8, ((NUM_STEPS + 2 + 7) // 8) * 8)  # full sublane tiles, never negative fill

assert GATE_W == SLAB_W, "parameter packing below assumes 4*HIDDEN_SIZE == 128"


def lstm_decoder_kernel(tok_ref, ftab_ref, wbf_ref, out_ref):
    """Whole LSTM sequence + decoder in one program.

    tok_ref : (T,) int32, SMEM            token ids
    ftab_ref: (V+1, 128) f32, VMEM        rows 0..V-1: E = emb @ W_ih^T + (b_ih + b_hh)
                                          row  V     : decoder bias (lanes 0..V-1)
    wbf_ref : (2H, 128) bf16, VMEM        rows 0..H-1 : W_hh^T
                                          rows H..2H-1: decoder W^T (lanes 0..V-1)
    out_ref : (OUT_ROWS, 128) f32, VMEM   rows 0..T-1: logits (lanes 0..V-1 valid)
                                          row  T     : final h (lanes 0..H-1 valid)
                                          row  T+1   : final c (lanes 0..H-1 valid)
    """
    H, T, V = HIDDEN_SIZE, NUM_STEPS, N_CHARACTERS

    whh = wbf_ref[0:H, :]            # (H, 4H)   bf16
    wdec = wbf_ref[H:2 * H, :]       # (H, V_PAD) bf16
    b_dec = ftab_ref[V:V + 1, :]     # (1, V_PAD) f32

    # Per-step fused (embedding -> input projection -> +bias) rows.  Depend only on
    # the SMEM token scalars, so these loads sit off the serial recurrence chain.
    gx = [ftab_ref[pl.ds(tok_ref[t], 1), :] for t in range(T)]      # T x (1, 4H) f32

    def gates_to_ifgo(gates):
        # One EUP push for both nonlinearities: sigmoid(x) = 0.5*tanh(0.5x) + 0.5.
        stacked = jnp.concatenate([0.5 * gates, gates], axis=0)     # (2, 4H)
        tstk = jnp.tanh(stacked)
        s = 0.5 * tstk[0:1, :] + 0.5                                 # sigmoid(gates)
        th = tstk[1:2, :]                                            # tanh(gates)
        # PyTorch gate order [i, f, g, o].
        i = s[:, 0 * H:1 * H]
        f = s[:, 1 * H:2 * H]
        g = th[:, 2 * H:3 * H]
        o = s[:, 3 * H:4 * H]
        return i, f, g, o

    # ---- step 0: zero initial state -> skip h @ W_hh and the f*c term entirely ----
    i, f, g, o = gates_to_ifgo(gx[0])
    c = i * g
    h = o * jnp.tanh(c)
    hs = [h]

    # ---- remaining steps, fully unrolled (T is a static compile-time constant) ----
    for t in range(1, T):
        gates = gx[t] + jnp.dot(h.astype(jnp.bfloat16), whh,
                                preferred_element_type=jnp.float32)  # (1, 4H)
        i, f, g, o = gates_to_ifgo(gates)
        c = f * c + i * g
        h = o * jnp.tanh(c)
        hs.append(h)

    # Decoder: one (T,H) @ (H,128) bf16 matmul, f32 accumulation + f32 bias.
    hseq = jnp.concatenate(hs, axis=0).astype(jnp.bfloat16)          # (T, H)
    logits = (jnp.dot(hseq, wdec, preferred_element_type=jnp.float32)
              + b_dec)                                               # (T, V_PAD)

    # Pack logits + final (h, c) into one lane-dense slab -> single unmasked
    # full-tile store / single output DMA.
    lane_pad = jnp.zeros((1, V_PAD - H), jnp.float32)
    rows = [logits,
            jnp.concatenate([h, lane_pad], axis=1),
            jnp.concatenate([c, lane_pad], axis=1)]
    n_fill = OUT_ROWS - T - 2
    if n_fill > 0:
        rows.append(jnp.zeros((n_fill, V_PAD), jnp.float32))
    out_ref[...] = jnp.concatenate(rows, axis=0)


def init_params(key):
    """Deterministic parameter init mimicking PyTorch defaults (shapes only)."""
    H, V = HIDDEN_SIZE, N_CHARACTERS
    k = 1.0 / jnp.sqrt(jnp.float32(H))
    ks = jax.random.split(key, 8)
    return {
        "embedding": jax.random.normal(ks[0], (V, H), jnp.float32),   # nn.Embedding
        "w_ih": jax.random.uniform(ks[1], (4 * H, H), jnp.float32, -k, k),
        "w_hh": jax.random.uniform(ks[2], (4 * H, H), jnp.float32, -k, k),
        "b_ih": jax.random.uniform(ks[3], (4 * H,), jnp.float32, -k, k),
        "b_hh": jax.random.uniform(ks[4], (4 * H,), jnp.float32, -k, k),
        "w_dec": jax.random.uniform(ks[5], (V, H), jnp.float32, -k, k),
        "b_dec": jax.random.uniform(ks[6], (V,), jnp.float32, -k, k),
    }


def prepare_params(params):
    """One-time layout prep (hoisted out of the per-call forward).

    Fuses embedding -> input projection -> (b_ih + b_hh) into one f32 table,
    appends the decoder bias row, and packs the bf16 MXU operands (W_hh^T and the
    lane-padded decoder weight) into a single slab.  Padded lanes are exactly zero,
    so slicing logits back to V=16 in the wrapper is lossless.
    """
    H, V = HIDDEN_SIZE, N_CHARACTERS
    e_tab = (params["embedding"] @ params["w_ih"].T
             + (params["b_ih"] + params["b_hh"])[None, :])            # (V, 4H) f32
    ftab = jnp.zeros((V + 1, SLAB_W), jnp.float32)
    ftab = ftab.at[:V, :GATE_W].set(e_tab)
    ftab = ftab.at[V, :V].set(params["b_dec"])

    wbf = jnp.zeros((2 * H, SLAB_W), jnp.bfloat16)
    wbf = wbf.at[:H, :GATE_W].set(params["w_hh"].T.astype(jnp.bfloat16))
    wbf = wbf.at[H:, :V].set(params["w_dec"].T.astype(jnp.bfloat16))
    return {"ftab": ftab, "wbf16": wbf}


def rnn_forward(tokens, prepped):
    """Equivalent of RNN.forward(input, hidden).

    Note: the PyTorch forward calls `self.lstm(input)` WITHOUT the passed-in
    hidden, so the LSTM always starts from zero state — reproduced here.
    """
    H, V, T, B = HIDDEN_SIZE, N_CHARACTERS, NUM_STEPS, BATCH_SIZE
    toks = tokens.reshape(T).astype(jnp.int32)

    vmem = pl.BlockSpec(memory_space=pltpu.MemorySpace.VMEM)
    smem = pl.BlockSpec(memory_space=pltpu.MemorySpace.SMEM)
    out = pl.pallas_call(
        lstm_decoder_kernel,
        out_shape=jax.ShapeDtypeStruct((OUT_ROWS, V_PAD), jnp.float32),
        in_specs=[smem, vmem, vmem],
        out_specs=vmem,
    )(toks, prepped["ftab"], prepped["wbf16"])

    logits = out[:T, :V]
    h_n = out[T:T + 1, :H].reshape(N_LAYERS, B, H)
    c_n = out[T + 1:T + 2, :H].reshape(N_LAYERS, B, H)
    output = logits.reshape(B, T, V)                # (batch, num_steps, N_CHARACTERS)
    return output, (h_n, c_n)


def _reference_forward(tokens, params):
    """Pure-JAX f32 reference of the same forward pass (for a sanity check)."""
    H = HIDDEN_SIZE
    emb = params["embedding"][tokens].reshape(NUM_STEPS, H)
    wih_t = params["w_ih"].T
    whh_t = params["w_hh"].T
    bias = params["b_ih"] + params["b_hh"]
    h = jnp.zeros((1, H), jnp.float32)
    c = jnp.zeros((1, H), jnp.float32)
    hs = []
    for t in range(NUM_STEPS):
        x_t = emb[t:t + 1]
        gates = x_t @ wih_t + h @ whh_t + bias
        i = jax.nn.sigmoid(gates[:, 0 * H:1 * H])
        f = jax.nn.sigmoid(gates[:, 1 * H:2 * H])
        g = jnp.tanh(gates[:, 2 * H:3 * H])
        o = jax.nn.sigmoid(gates[:, 3 * H:4 * H])
        c = f * c + i * g
        h = o * jnp.tanh(c)
        hs.append(h)
    hseq = jnp.concatenate(hs, axis=0)
    logits = hseq @ params["w_dec"].T + params["b_dec"]
    output = logits.reshape(BATCH_SIZE, NUM_STEPS, N_CHARACTERS)
    return output, (h.reshape(N_LAYERS, BATCH_SIZE, H),
                    c.reshape(N_LAYERS, BATCH_SIZE, H))


if __name__ == "__main__":
    key = jax.random.PRNGKey(0)
    pkey, tkey = jax.random.split(key)
    params = init_params(pkey)
    prepped = prepare_params(params)        # one-time layout prep (hoisted)

    tokens = jax.random.randint(tkey, (BATCH_SIZE, NUM_STEPS), 0, N_CHARACTERS,
                                dtype=jnp.int32)

    forward = jax.jit(rnn_forward)
    output, (h_n, c_n) = forward(tokens, prepped)
    jax.block_until_ready((output, h_n, c_n))

    assert output.shape == (BATCH_SIZE, NUM_STEPS, N_CHARACTERS)
    assert h_n.shape == (N_LAYERS, BATCH_SIZE, HIDDEN_SIZE)
    assert c_n.shape == (N_LAYERS, BATCH_SIZE, HIDDEN_SIZE)

    ref_out, (ref_h, ref_c) = _reference_forward(tokens, params)
    assert jnp.allclose(output, ref_out, rtol=1e-2, atol=1e-2), "logits mismatch"
    assert jnp.allclose(h_n, ref_h, rtol=1e-2, atol=1e-2), "h_n mismatch"
    assert jnp.allclose(c_n, ref_c, rtol=1e-2, atol=1e-2), "c_n mismatch"

    print("KERNEL_OK")
</pallas_src>

<mosaic_0001>
module attributes {stable_mosaic.version = 11 : i64} {
  func.func @lstm_decoder_kernel(%arg0: memref<5xi32, #tpu.memory_space<smem>>, %arg1: memref<17x128xf32, #tpu.memory_space<vmem>>, %arg2: memref<64x128xbf16, #tpu.memory_space<vmem>>, %arg3: memref<8x128xf32, #tpu.memory_space<vmem>>) attributes {dimension_semantics = [], scalar_prefetch = 0 : i64, scratch_operands = 0 : i64, tpu.core_type = #tpu.core_type<tc>} {
    %c0 = arith.constant 0 : index
    %c0_0 = arith.constant 0 : index
    %0 = vector.load %arg2[%c0, %c0_0] : memref<64x128xbf16, #tpu.memory_space<vmem>>, vector<32x128xbf16>
    %c32 = arith.constant 32 : index
    %c0_1 = arith.constant 0 : index
    %1 = vector.load %arg2[%c32, %c0_1] : memref<64x128xbf16, #tpu.memory_space<vmem>>, vector<32x128xbf16>
    %c16 = arith.constant 16 : index
    %c0_2 = arith.constant 0 : index
    %2 = vector.load %arg1[%c16, %c0_2] : memref<17x128xf32, #tpu.memory_space<vmem>>, vector<1x128xf32>
    %c0_3 = arith.constant 0 : index
    %3 = memref.load %arg0[%c0_3] : memref<5xi32, #tpu.memory_space<smem>>
    %4 = arith.index_cast %3 : i32 to index
    %c0_4 = arith.constant 0 : index
    %5 = vector.load %arg1[%4, %c0_4] : memref<17x128xf32, #tpu.memory_space<vmem>>, vector<1x128xf32>
    %c1 = arith.constant 1 : index
    %6 = memref.load %arg0[%c1] : memref<5xi32, #tpu.memory_space<smem>>
    %7 = arith.index_cast %6 : i32 to index
    %c0_5 = arith.constant 0 : index
    %8 = vector.load %arg1[%7, %c0_5] : memref<17x128xf32, #tpu.memory_space<vmem>>, vector<1x128xf32>
    %c2 = arith.constant 2 : index
    %9 = memref.load %arg0[%c2] : memref<5xi32, #tpu.memory_space<smem>>
    %10 = arith.index_cast %9 : i32 to index
    %c0_6 = arith.constant 0 : index
    %11 = vector.load %arg1[%10, %c0_6] : memref<17x128xf32, #tpu.memory_space<vmem>>, vector<1x128xf32>
    %c3 = arith.constant 3 : index
    %12 = memref.load %arg0[%c3] : memref<5xi32, #tpu.memory_space<smem>>
    %13 = arith.index_cast %12 : i32 to index
    %c0_7 = arith.constant 0 : index
    %14 = vector.load %arg1[%13, %c0_7] : memref<17x128xf32, #tpu.memory_space<vmem>>, vector<1x128xf32>
    %c4 = arith.constant 4 : index
    %15 = memref.load %arg0[%c4] : memref<5xi32, #tpu.memory_space<smem>>
    %16 = arith.index_cast %15 : i32 to index
    %c0_8 = arith.constant 0 : index
    %17 = vector.load %arg1[%16, %c0_8] : memref<17x128xf32, #tpu.memory_space<vmem>>, vector<1x128xf32>
    %cst = arith.constant 5.000000e-01 : f32
    %18 = vector.broadcast %cst : f32 to vector<1x128xf32>
    %19 = arith.mulf %18, %5 : vector<1x128xf32>
    %20 = tpu.concatenate %19, %5 in 0 : vector<1x128xf32>, vector<1x128xf32> -> vector<2x128xf32>
    %21 = math.tanh %20 : vector<2x128xf32>
    %22 = vector.extract_strided_slice %21 {offsets = [0, 0], sizes = [1, 128], strides = [1, 1]} : vector<2x128xf32> to vector<1x128xf32>
    %cst_9 = arith.constant 5.000000e-01 : f32
    %23 = vector.broadcast %cst_9 : f32 to vector<1x128xf32>
    %24 = arith.mulf %23, %22 : vector<1x128xf32>
    %cst_10 = arith.constant 5.000000e-01 : f32
    %25 = vector.broadcast %cst_10 : f32 to vector<1x128xf32>
    %26 = arith.addf %24, %25 : vector<1x128xf32>
    %27 = vector.extract_strided_slice %21 {offsets = [1, 0], sizes = [1, 128], strides = [1, 1]} : vector<2x128xf32> to vector<1x128xf32>
    %28 = vector.extract_strided_slice %26 {offsets = [0, 0], sizes = [1, 32], strides = [1, 1]} : vector<1x128xf32> to vector<1x32xf32>
    %29 = vector.extract_strided_slice %27 {offsets = [0, 64], sizes = [1, 32], strides = [1, 1]} : vector<1x128xf32> to vector<1x32xf32>
    %30 = vector.extract_strided_slice %26 {offsets = [0, 96], sizes = [1, 32], strides = [1, 1]} : vector<1x128xf32> to vector<1x32xf32>
    %31 = arith.mulf %28, %29 : vector<1x32xf32>
    %32 = math.tanh %31 : vector<1x32xf32>
    %33 = arith.mulf %30, %32 : vector<1x32xf32>
    %34 = arith.truncf %33 : vector<1x32xf32> to vector<1x32xbf16>
    %cst_11 = arith.constant dense<0.000000e+00> : vector<1x128xf32>
    %35 = tpu.matmul %34, %0, %cst_11 {dimension_numbers = #tpu.dot_dimension_numbers<[1], [0], [0], [1], [0, 0, 1, 1], [], []>} : vector<1x32xbf16>, vector<32x128xbf16>, vector<1x128xf32> -> vector<1x128xf32>
    %36 = arith.addf %8, %35 : vector<1x128xf32>
    %cst_12 = arith.constant 5.000000e-01 : f32
    %37 = vector.broadcast %cst_12 : f32 to vector<1x128xf32>
    %38 = arith.mulf %37, %36 : vector<1x128xf32>
    %39 = tpu.concatenate %38, %36 in 0 : vector<1x128xf32>, vector<1x128xf32> -> vector<2x128xf32>
    %40 = math.tanh %39 : vector<2x128xf32>
    %41 = vector.extract_strided_slice %40 {offsets = [0, 0], sizes = [1, 128], strides = [1, 1]} : vector<2x128xf32> to vector<1x128xf32>
    %cst_13 = arith.constant 5.000000e-01 : f32
    %42 = vector.broadcast %cst_13 : f32 to vector<1x128xf32>
    %43 = arith.mulf %42, %41 : vector<1x128xf32>
    %cst_14 = arith.constant 5.000000e-01 : f32
    %44 = vector.broadcast %cst_14 : f32 to vector<1x128xf32>
    %45 = arith.addf %43, %44 : vector<1x128xf32>
    %46 = vector.extract_strided_slice %40 {offsets = [1, 0], sizes = [1, 128], strides = [1, 1]} : vector<2x128xf32> to vector<1x128xf32>
    %47 = vector.extract_strided_slice %45 {offsets = [0, 0], sizes = [1, 32], strides = [1, 1]} : vector<1x128xf32> to vector<1x32xf32>
    %48 = vector.extract_strided_slice %45 {offsets = [0, 32], sizes = [1, 32], strides = [1, 1]} : vector<1x128xf32> to vector<1x32xf32>
    %49 = vector.extract_strided_slice %46 {offsets = [0, 64], sizes = [1, 32], strides = [1, 1]} : vector<1x128xf32> to vector<1x32xf32>
    %50 = vector.extract_strided_slice %45 {offsets = [0, 96], sizes = [1, 32], strides = [1, 1]} : vector<1x128xf32> to vector<1x32xf32>
    %51 = arith.mulf %48, %31 : vector<1x32xf32>
    %52 = arith.mulf %47, %49 : vector<1x32xf32>
    %53 = arith.addf %51, %52 : vector<1x32xf32>
    %54 = math.tanh %53 : vector<1x32xf32>
    %55 = arith.mulf %50, %54 : vector<1x32xf32>
    %56 = arith.truncf %55 : vector<1x32xf32> to vector<1x32xbf16>
    %cst_15 = arith.constant dense<0.000000e+00> : vector<1x128xf32>
    %57 = tpu.matmul %56, %0, %cst_15 {dimension_numbers = #tpu.dot_dimension_numbers<[1], [0], [0], [1], [0, 0, 1, 1], [], []>} : vector<1x32xbf16>, vector<32x128xbf16>, vector<1x128xf32> -> vector<1x128xf32>
    %58 = arith.addf %11, %57 : vector<1x128xf32>
    %cst_16 = arith.constant 5.000000e-01 : f32
    %59 = vector.broadcast %cst_16 : f32 to vector<1x128xf32>
    %60 = arith.mulf %59, %58 : vector<1x128xf32>
    %61 = tpu.concatenate %60, %58 in 0 : vector<1x128xf32>, vector<1x128xf32> -> vector<2x128xf32>
    %62 = math.tanh %61 : vector<2x128xf32>
    %63 = vector.extract_strided_slice %62 {offsets = [0, 0], sizes = [1, 128], strides = [1, 1]} : vector<2x128xf32> to vector<1x128xf32>
    %cst_17 = arith.constant 5.000000e-01 : f32
    %64 = vector.broadcast %cst_17 : f32 to vector<1x128xf32>
    %65 = arith.mulf %64, %63 : vector<1x128xf32>
    %cst_18 = arith.constant 5.000000e-01 : f32
    %66 = vector.broadcast %cst_18 : f32 to vector<1x128xf32>
    %67 = arith.addf %65, %66 : vector<1x128xf32>
    %68 = vector.extract_strided_slice %62 {offsets = [1, 0], sizes = [1, 128], strides = [1, 1]} : vector<2x128xf32> to vector<1x128xf32>
    %69 = vector.extract_strided_slice %67 {offsets = [0, 0], sizes = [1, 32], strides = [1, 1]} : vector<1x128xf32> to vector<1x32xf32>
    %70 = vector.extract_strided_slice %67 {offsets = [0, 32], sizes = [1, 32], strides = [1, 1]} : vector<1x128xf32> to vector<1x32xf32>
    %71 = vector.extract_strided_slice %68 {offsets = [0, 64], sizes = [1, 32], strides = [1, 1]} : vector<1x128xf32> to vector<1x32xf32>
    %72 = vector.extract_strided_slice %67 {offsets = [0, 96], sizes = [1, 32], strides = [1, 1]} : vector<1x128xf32> to vector<1x32xf32>
    %73 = arith.mulf %70, %53 : vector<1x32xf32>
    %74 = arith.mulf %69, %71 : vector<1x32xf32>
    %75 = arith.addf %73, %74 : vector<1x32xf32>
    %76 = math.tanh %75 : vector<1x32xf32>
    %77 = arith.mulf %72, %76 : vector<1x32xf32>
    %78 = arith.truncf %77 : vector<1x32xf32> to vector<1x32xbf16>
    %cst_19 = arith.constant dense<0.000000e+00> : vector<1x128xf32>
    %79 = tpu.matmul %78, %0, %cst_19 {dimension_numbers = #tpu.dot_dimension_numbers<[1], [0], [0], [1], [0, 0, 1, 1], [], []>} : vector<1x32xbf16>, vector<32x128xbf16>, vector<1x128xf32> -> vector<1x128xf32>
    %80 = arith.addf %14, %79 : vector<1x128xf32>
    %cst_20 = arith.constant 5.000000e-01 : f32
    %81 = vector.broadcast %cst_20 : f32 to vector<1x128xf32>
    %82 = arith.mulf %81, %80 : vector<1x128xf32>
    %83 = tpu.concatenate %82, %80 in 0 : vector<1x128xf32>, vector<1x128xf32> -> vector<2x128xf32>
    %84 = math.tanh %83 : vector<2x128xf32>
    %85 = vector.extract_strided_slice %84 {offsets = [0, 0], sizes = [1, 128], strides = [1, 1]} : vector<2x128xf32> to vector<1x128xf32>
    %cst_21 = arith.constant 5.000000e-01 : f32
    %86 = vector.broadcast %cst_21 : f32 to vector<1x128xf32>
    %87 = arith.mulf %86, %85 : vector<1x128xf32>
    %cst_22 = arith.constant 5.000000e-01 : f32
    %88 = vector.broadcast %cst_22 : f32 to vector<1x128xf32>
    %89 = arith.addf %87, %88 : vector<1x128xf32>
    %90 = vector.extract_strided_slice %84 {offsets = [1, 0], sizes = [1, 128], strides = [1, 1]} : vector<2x128xf32> to vector<1x128xf32>
    %91 = vector.extract_strided_slice %89 {offsets = [0, 0], sizes = [1, 32], strides = [1, 1]} : vector<1x128xf32> to vector<1x32xf32>
    %92 = vector.extract_strided_slice %89 {offsets = [0, 32], sizes = [1, 32], strides = [1, 1]} : vector<1x128xf32> to vector<1x32xf32>
    %93 = vector.extract_strided_slice %90 {offsets = [0, 64], sizes = [1, 32], strides = [1, 1]} : vector<1x128xf32> to vector<1x32xf32>
    %94 = vector.extract_strided_slice %89 {offsets = [0, 96], sizes = [1, 32], strides = [1, 1]} : vector<1x128xf32> to vector<1x32xf32>
    %95 = arith.mulf %92, %75 : vector<1x32xf32>
    %96 = arith.mulf %91, %93 : vector<1x32xf32>
    %97 = arith.addf %95, %96 : vector<1x32xf32>
    %98 = math.tanh %97 : vector<1x32xf32>
    %99 = arith.mulf %94, %98 : vector<1x32xf32>
    %100 = arith.truncf %99 : vector<1x32xf32> to vector<1x32xbf16>
    %cst_23 = arith.constant dense<0.000000e+00> : vector<1x128xf32>
    %101 = tpu.matmul %100, %0, %cst_23 {dimension_numbers = #tpu.dot_dimension_numbers<[1], [0], [0], [1], [0, 0, 1, 1], [], []>} : vector<1x32xbf16>, vector<32x128xbf16>, vector<1x128xf32> -> vector<1x128xf32>
    %102 = arith.addf %17, %101 : vector<1x128xf32>
    %cst_24 = arith.constant 5.000000e-01 : f32
    %103 = vector.broadcast %cst_24 : f32 to vector<1x128xf32>
    %104 = arith.mulf %103, %102 : vector<1x128xf32>
    %105 = tpu.concatenate %104, %102 in 0 : vector<1x128xf32>, vector<1x128xf32> -> vector<2x128xf32>
    %106 = math.tanh %105 : vector<2x128xf32>
    %107 = vector.extract_strided_slice %106 {offsets = [0, 0], sizes = [1, 128], strides = [1, 1]} : vector<2x128xf32> to vector<1x128xf32>
    %cst_25 = arith.constant 5.000000e-01 : f32
    %108 = vector.broadcast %cst_25 : f32 to vector<1x128xf32>
    %109 = arith.mulf %108, %107 : vector<1x128xf32>
    %cst_26 = arith.constant 5.000000e-01 : f32
    %110 = vector.broadcast %cst_26 : f32 to vector<1x128xf32>
    %111 = arith.addf %109, %110 : vector<1x128xf32>
    %112 = vector.extract_strided_slice %106 {offsets = [1, 0], sizes = [1, 128], strides = [1, 1]} : vector<2x128xf32> to vector<1x128xf32>
    %113 = vector.extract_strided_slice %111 {offsets = [0, 0], sizes = [1, 32], strides = [1, 1]} : vector<1x128xf32> to vector<1x32xf32>
    %114 = vector.extract_strided_slice %111 {offsets = [0, 32], sizes = [1, 32], strides = [1, 1]} : vector<1x128xf32> to vector<1x32xf32>
    %115 = vector.extract_strided_slice %112 {offsets = [0, 64], sizes = [1, 32], strides = [1, 1]} : vector<1x128xf32> to vector<1x32xf32>
    %116 = vector.extract_strided_slice %111 {offsets = [0, 96], sizes = [1, 32], strides = [1, 1]} : vector<1x128xf32> to vector<1x32xf32>
    %117 = arith.mulf %114, %97 : vector<1x32xf32>
    %118 = arith.mulf %113, %115 : vector<1x32xf32>
    %119 = arith.addf %117, %118 : vector<1x32xf32>
    %120 = math.tanh %119 : vector<1x32xf32>
    %121 = arith.mulf %116, %120 : vector<1x32xf32>
    %122 = tpu.concatenate %33, %55, %77, %99, %121 in 0 : vector<1x32xf32>, vector<1x32xf32>, vector<1x32xf32>, vector<1x32xf32>, vector<1x32xf32> -> vector<5x32xf32>
    %123 = arith.truncf %122 : vector<5x32xf32> to vector<5x32xbf16>
    %cst_27 = arith.constant dense<0.000000e+00> : vector<5x128xf32>
    %124 = tpu.matmul %123, %1, %cst_27 {dimension_numbers = #tpu.dot_dimension_numbers<[1], [0], [0], [1], [0, 0, 1, 1], [], []>} : vector<5x32xbf16>, vector<32x128xbf16>, vector<5x128xf32> -> vector<5x128xf32>
    %125 = vector.broadcast %2 : vector<1x128xf32> to vector<5x128xf32>
    %126 = arith.addf %124, %125 : vector<5x128xf32>
    %cst_28 = arith.constant 0.000000e+00 : f32
    %127 = vector.broadcast %cst_28 : f32 to vector<1x96xf32>
    %128 = tpu.concatenate %121, %127 in 1 : vector<1x32xf32>, vector<1x96xf32> -> vector<1x128xf32>
    %129 = tpu.concatenate %119, %127 in 1 : vector<1x32xf32>, vector<1x96xf32> -> vector<1x128xf32>
    %cst_29 = arith.constant 0.000000e+00 : f32
    %130 = vector.broadcast %cst_29 : f32 to vector<1x128xf32>
    %131 = tpu.concatenate %126, %128, %129, %130 in 0 : vector<5x128xf32>, vector<1x128xf32>, vector<1x128xf32>, vector<1x128xf32> -> vector<8x128xf32>
    %c0_30 = arith.constant 0 : index
    %c0_31 = arith.constant 0 : index
    %132 = vector.load %arg3[%c0_30, %c0_31] : memref<8x128xf32, #tpu.memory_space<vmem>>, vector<8x128xf32>
    tpu.vector_store %arg3[%c0_30, %c0_31], %131 {strides = array<i32>} : memref<8x128xf32, #tpu.memory_space<vmem>>, vector<8x128xf32>,
    return
  }
}

</mosaic_0001>

<llo_original>
// kernel: rnn_forward.1
$region0: #{rnn_forward.1}
  #allocation0 [shape = 'u32[]', space=smem, size = 0x4, offset = 0x4, fixed_abs, tag = 'smem constant byte address 0x4 - core index']
  #allocation1 [shape = 'u32[144,128]{1,0:T(1,128)}', space=vmem, size = 0x12000, scoped, tag = 'internal scratch']
  %s0 = inlined_call_operand.vmem [shape: s32[5], index: 0, kind: input, shape index: {}]
  %s1 = inlined_call_operand.hbm [shape: f32[17,128], index: 1, kind: input, shape index: {}]
  %s2 = inlined_call_operand.hbm [shape: bf16[64,128], index: 2, kind: input, shape index: {}]
  %s3 = inlined_call_operand.vmem [shape: f32[8,128], index: 3, kind: output, shape index: {}]
  %s4 = sld [smem:[#allocation0]]
  $region34: #{rnn_forward.1} parent=0
    _
  %s6 = ssub.s32 1, %s4
  %s7 = scalar_select 0, %s6, %s4
  $region1: #{rnn_forward.1} parent=0
    #allocation2 [shape = 'u8[512]{0}', space=smem, size = 0x200, scoped, tag = 'input window, operand 0, single buffered']
    #allocation3 [shape = 's32[1]{0}', space=sflag, size = 0x4, scoped, tag = 'scoped memory for rnn_forward.1']
    #allocation4 [shape = 's32[1]{0}', space=sflag, size = 0x4, scoped, tag = 'scoped memory for rnn_forward.1']
    #allocation5 [shape = 'u8[12288]{0}', space=vmem, size = 0x3000, scoped, tag = 'input window, operand 1, single buffered']
    #allocation6 [shape = 'u8[16384]{0}', space=vmem, size = 0x4000, scoped, tag = 'input window, operand 2, single buffered']
    #allocation7 [shape = 's32[1]{0}', space=sflag, size = 0x4, scoped, tag = 'scoped memory for rnn_forward.1']
    %8 = vsyncpa [#allocation4], 0
    %9 = vsyncpa [#allocation3], 0
    %10 = vsyncpa [#allocation7], 0
    // Predicated region
    $region2: #{rnn_forward.1} parent=1 // pred_check
      _
    $region3: #{rnn_forward.1} parent=1 // pred_check_branch
      %12 = sbr.rel (0) target = $region5
    $region4: #{rnn_forward.1} parent=1 // pred_region
      %s14 = ssub.s32 16, 16
      %15 = vsyncadd [#allocation4], %s14
      %s17 = sshll.u32 %s0, 4
      %s18 = int_to_ptr.vmem [resolvable:$true] %s17
      %20 = dma.vmem_to_smem %s18, 16, [#allocation2], [#allocation4]
    $region5: #{rnn_forward.1} parent=1 // pred_fallthru
      _
    // Predicated region
    $region6: #{rnn_forward.1} parent=1 // pred_check
      _
    $region7: #{rnn_forward.1} parent=1 // pred_check_branch
      %22 = sbr.rel (0) target = $region9
    $region8: #{rnn_forward.1} parent=1 // pred_region
      %s24 = ssub.s32 384, 384
      %25 = vsyncadd [#allocation3], %s24
      %s26 = sshll.u32 [#allocation5], 4
      %s27 = int_to_ptr.vmem [resolvable:$true] %s26
      %32 = dma.hbm_to_vmem [thread:$0]  %s1, 384, %s27, [#allocation3], 128, 128, 8
    $region9: #{rnn_forward.1} parent=1 // pred_fallthru
      _
    // Predicated region
    $region10: #{rnn_forward.1} parent=1 // pred_check
      _
    $region11: #{rnn_forward.1} parent=1 // pred_check_branch
      %34 = sbr.rel (0) target = $region13
    $region12: #{rnn_forward.1} parent=1 // pred_region
      %s36 = ssub.s32 512, 512
      %37 = vsyncadd [#allocation7], %s36
      %s38 = sshll.u32 [#allocation6], 4
      %s39 = int_to_ptr.vmem [resolvable:$true] %s38
      %44 = dma.hbm_to_vmem [thread:$0]  %s2, 512, %s39, [#allocation7], 64, 64, 4
    $region13: #{rnn_forward.1} parent=1 // pred_fallthru
      _
    // Predicated region
    $region14: #{rnn_forward.1} parent=1 // pred_check
      _
    $region15: #{rnn_forward.1} parent=1 // pred_check_branch
      %46 = sbr.rel (0) target = $region17
    $region16: #{rnn_forward.1} parent=1 // pred_region
      %47 = dma.done [#allocation4], 16
    $region17: #{rnn_forward.1} parent=1 // pred_fallthru
      _
    // Predicated region
    $region18: #{rnn_forward.1} parent=1 // pred_check
      _
    $region19: #{rnn_forward.1} parent=1 // pred_check_branch
      %49 = sbr.rel (0) target = $region21
    $region20: #{rnn_forward.1} parent=1 // pred_region
      %50 = dma.done [#allocation3], 384
    $region21: #{rnn_forward.1} parent=1 // pred_fallthru
      _
    // Predicated region
    $region22: #{rnn_forward.1} parent=1 // pred_check
      _
    $region23: #{rnn_forward.1} parent=1 // pred_check_branch
      %52 = sbr.rel (0) target = $region25
    $region24: #{rnn_forward.1} parent=1 // pred_region
      %53 = dma.done [#allocation7], 512
    $region25: #{rnn_forward.1} parent=1 // pred_fallthru
      _
    %54 = sfence
    %v56 = vld [vmem:[#allocation6] sm:$0xf]
    %v57 = vld [vmem:[#allocation6 + $0x4] sm:$0xf]
    %v58 = vld [vmem:[#allocation6 + $0x8] sm:$0xf]
    %v59 = vld [vmem:[#allocation6 + $0xc] sm:$0xf]
    %v60 = vld [vmem:[#allocation6 + $0x10] sm:$0xf]
    %v61 = vld [vmem:[#allocation6 + $0x14] sm:$0xf]
    %v62 = vld [vmem:[#allocation6 + $0x18] sm:$0xf]
    %v63 = vld [vmem:[#allocation6 + $0x1c] sm:$0xf]
    %v64 = vld [vmem:[#allocation5 + $0x10] sm:$0x1]
    %s65 = sld [smem:[#allocation2]]
    %s66 = scalar_lea.vmem [#allocation5], %s65
    %v67 = vld [vmem:[%s66] sm:$0x1]
    %s68 = sld [smem:[#allocation2 + $0x1]]
    %s69 = scalar_lea.vmem [#allocation5], %s68
    %v70 = vld [vmem:[%s69] sm:$0x1]
    %s71 = sld [smem:[#allocation2 + $0x2]]
    %s72 = scalar_lea.vmem [#allocation5], %s71
    %v73 = vld [vmem:[%s72] sm:$0x1]
    %s74 = sld [smem:[#allocation2 + $0x3]]
    %s75 = scalar_lea.vmem [#allocation5], %s74
    %v76 = vld [vmem:[%s75] sm:$0x1]
    %s77 = sld [smem:[#allocation2 + $0x4]]
    %s78 = scalar_lea.vmem [#allocation5], %s77
    %v79 = vld [vmem:[%s78] sm:$0x1]
    %v80 = vmul.f32 %v67, 0.5
    %v82 = vrot.slane %v67, 7
    %vm84 = vcmask 1040384
    %v85 = vsel %vm84, %v80, %v82
    %v86 = vtanh.pop %v85
    %v87 = vmul.f32 %v86, 0.5
    %v88 = vadd.f32 %v87, 0.5
    %v90 = vrot.slane %v86, 1
    %91 = vrot.lane.b32.xlu0 %v90, 64
    %v92 = vpop.permute.xlu0 %91
    %v94 = vmul.f32 %v88, %v92
    %v95 = vtanh.pop %v94
    %97 = vrot.lane.b32.xlu0 %v95, 96
    %v98 = vpop.permute.xlu0 %97
    %v100 = vmul.f32 %v88, %v98
    %v101 = vpack.c.bf16 %v100, %v100
    %103 = vrot.lane.b32.xlu0 %v101, 32
    %v104 = vpop.permute.xlu0 %103
    %v109 = vunpack.c.l.b16 %v56
    %v110 = vunpack.c.l.b16 %v57
    %v111 = vunpack.c.l.b16 %v58
    %v112 = vunpack.c.l.b16 %v59
    %v113 = vpack.c.b16 %v110, %v109
    %v114 = vpack.c.b16 %v112, %v111
    %vm117 = vcmask 261120
    %v119 = vsel %vm117, %v104, 0
    %121 = vmatprep.subr.bf16.mxu0 0
    %122 = vmatpush1.bf16.msra.mxu0 %v113
    %123 = vmatprep.subr.bf16.mxu0 0
    %124 = vmatpush1.bf16.msra.mxu0 %v114
    %125 = vmatprep.subr.bf16.mxu0 0
    %126 = vmatpush1.bf16.msra.mxu0 0
    %127 = vmatprep.subr.bf16.mxu0 0
    %128 = vmatpush1.bf16.msra.mxu0 0
    %129 = vmatprep.subr.bf16.mxu0 0
    %130 = vmatpush1.bf16.msra.mxu0 0
    %131 = vmatprep.subr.bf16.mxu0 0
    %132 = vmatpush1.bf16.msra.mxu0 0
    %133 = vmatprep.subr.bf16.mxu0 0
    %134 = vmatpush1.bf16.msra.mxu0 0
    %135 = vmatprep.subr.bf16.mxu0 0
    %136 = vmatpush1.bf16.msra.mxu0 0
    %137 = vmatprep.subr.bf16.mxu0 0
    %138 = vmatpush1.bf16.msra.mxu0 0
    %139 = vmatprep.subr.bf16.mxu0 0
    %140 = vmatpush1.bf16.msra.mxu0 0
    %141 = vmatprep.subr.bf16.mxu0 0
    %142 = vmatpush1.bf16.msra.mxu0 0
    %143 = vmatprep.subr.bf16.mxu0 0
    %144 = vmatpush1.bf16.msra.mxu0 0
    %145 = vmatprep.subr.bf16.mxu0 0
    %146 = vmatpush1.bf16.msra.mxu0 0
    %147 = vmatprep.subr.bf16.mxu0 0
    %148 = vmatpush1.bf16.msra.mxu0 0
    %149 = vmatprep.subr.bf16.mxu0 0
    %150 = vmatpush1.bf16.msra.mxu0 0
    %151 = vmatprep.subr.bf16.mxu0 0
    %152 = vmatpush1.bf16.msra.mxu0 0
    %153 = vmatprep.mubr.bf16.mxu0 0
    %154 = vmatmul.mubr.bf16.gmra.mrb[0].mxu0 %v119
    %v155 = vpop.f32.mrb[0].mxu0
    %v156 = vadd.f32 0.0, %v155
    %v157 = vpop.f32.mrb[0].mxu0
    %v158 = vpop.f32.mrb[0].mxu0
    %v159 = vpop.f32.mrb[0].mxu0
    %160 = vdwg.mxu0
    %v161 = vadd.f32 %v70, %v156
    %v162 = vmul.f32 %v161, 0.5
    %v164 = vrot.slane %v161, 7
    %v166 = vsel %vm84, %v162, %v164
    %v167 = vtanh.pop %v166
    %v168 = vmul.f32 %v167, 0.5
    %v169 = vadd.f32 %v168, 0.5
    %171 = vrot.lane.b32.xlu0 %v94, 32
    %v172 = vpop.permute.xlu0 %171
    %v174 = vmul.f32 %v169, %v172
    %v176 = vrot.slane %v167, 1
    %177 = vrot.lane.b32.xlu0 %v176, 64
    %v178 = vpop.permute.xlu0 %177
    %v180 = vmul.f32 %v169, %v178
    %182 = vrot.lane.b32.xlu0 %v180, 32
    %v183 = vpop.permute.xlu0 %182
    %v185 = vadd.f32 %v174, %v183
    %v186 = vtanh.pop %v185
    %188 = vrot.lane.b32.xlu0 %v186, 64
    %v189 = vpop.permute.xlu0 %188
    %v191 = vmul.f32 %v169, %v189
    %v192 = vpack.c.bf16 %v191, %v191
    %194 = vrot.lane.b32.xlu0 %v192, 32
    %v195 = vpop.permute.xlu0 %194
    %v197 = vsel %vm117, %v195, 0
    %199 = vmatprep.subr.bf16.mxu0 0
    %200 = vmatpush1.bf16.msra.mxu0 %v113
    %201 = vmatprep.subr.bf16.mxu0 0
    %202 = vmatpush1.bf16.msra.mxu0 %v114
    %203 = vmatprep.subr.bf16.mxu0 0
    %204 = vmatpush1.bf16.msra.mxu0 0
    %205 = vmatprep.subr.bf16.mxu0 0
    %206 = vmatpush1.bf16.msra.mxu0 0
    %207 = vmatprep.subr.bf16.mxu0 0
    %208 = vmatpush1.bf16.msra.mxu0 0
    %209 = vmatprep.subr.bf16.mxu0 0
    %210 = vmatpush1.bf16.msra.mxu0 0
    %211 = vmatprep.subr.bf16.mxu0 0
    %212 = vmatpush1.bf16.msra.mxu0 0
    %213 = vmatprep.subr.bf16.mxu0 0
    %214 = vmatpush1.bf16.msra.mxu0 0
    %215 = vmatprep.subr.bf16.mxu0 0
    %216 = vmatpush1.bf16.msra.mxu0 0
    %217 = vmatprep.subr.bf16.mxu0 0
    %218 = vmatpush1.bf16.msra.mxu0 0
    %219 = vmatprep.subr.bf16.mxu0 0
    %220 = vmatpush1.bf16.msra.mxu0 0
    %221 = vmatprep.subr.bf16.mxu0 0
    %222 = vmatpush1.bf16.msra.mxu0 0
    %223 = vmatprep.subr.bf16.mxu0 0
    %224 = vmatpush1.bf16.msra.mxu0 0
    %225 = vmatprep.subr.bf16.mxu0 0
    %226 = vmatpush1.bf16.msra.mxu0 0
    %227 = vmatprep.subr.bf16.mxu0 0
    %228 = vmatpush1.bf16.msra.mxu0 0
    %229 = vmatprep.subr.bf16.mxu0 0
    %230 = vmatpush1.bf16.msra.mxu0 0
    %231 = vmatprep.mubr.bf16.mxu0 0
    %232 = vmatmul.mubr.bf16.gmra.mrb[0].mxu0 %v197
    %v233 = vpop.f32.mrb[0].mxu0
    %v234 = vadd.f32 0.0, %v233
    %v235 = vpop.f32.mrb[0].mxu0
    %v236 = vpop.f32.mrb[0].mxu0
    %v237 = vpop.f32.mrb[0].mxu0
    %238 = vdwg.mxu0
    %v239 = vadd.f32 %v73, %v234
    %v240 = vmul.f32 %v239, 0.5
    %v242 = vrot.slane %v239, 7
    %v244 = vsel %vm84, %v240, %v242
    %v245 = vtanh.pop %v244
    %v246 = vmul.f32 %v245, 0.5
    %v247 = vadd.f32 %v246, 0.5
    %v248 = vmul.f32 %v247, %v185
    %v250 = vrot.slane %v245, 1
    %251 = vrot.lane.b32.xlu0 %v250, 64
    %v252 = vpop.permute.xlu0 %251
    %v254 = vmul.f32 %v247, %v252
    %256 = vrot.lane.b32.xlu0 %v254, 32
    %v257 = vpop.permute.xlu0 %256
    %v259 = vadd.f32 %v248, %v257
    %v260 = vtanh.pop %v259
    %262 = vrot.lane.b32.xlu0 %v260, 64
    %v263 = vpop.permute.xlu0 %262
    %v265 = vmul.f32 %v247, %v263
    %v266 = vpack.c.bf16 %v265, %v265
    %268 = vrot.lane.b32.xlu0 %v266, 32
    %v269 = vpop.permute.xlu0 %268
    %v271 = vsel %vm117, %v269, 0
    %273 = vmatprep.subr.bf16.mxu0 0
    %274 = vmatpush1.bf16.msra.mxu0 %v113
    %275 = vmatprep.subr.bf16.mxu0 0
    %276 = vmatpush1.bf16.msra.mxu0 %v114
    %277 = vmatprep.subr.bf16.mxu0 0
    %278 = vmatpush1.bf16.msra.mxu0 0
    %279 = vmatprep.subr.bf16.mxu0 0
    %280 = vmatpush1.bf16.msra.mxu0 0
    %281 = vmatprep.subr.bf16.mxu0 0
    %282 = vmatpush1.bf16.msra.mxu0 0
    %283 = vmatprep.subr.bf16.mxu0 0
    %284 = vmatpush1.bf16.msra.mxu0 0
    %285 = vmatprep.subr.bf16.mxu0 0
    %286 = vmatpush1.bf16.msra.mxu0 0
    %287 = vmatprep.subr.bf16.mxu0 0
    %288 = vmatpush1.bf16.msra.mxu0 0
    %289 = vmatprep.subr.bf16.mxu0 0
    %290 = vmatpush1.bf16.msra.mxu0 0
    %291 = vmatprep.subr.bf16.mxu0 0
    %292 = vmatpush1.bf16.msra.mxu0 0
    %293 = vmatprep.subr.bf16.mxu0 0
    %294 = vmatpush1.bf16.msra.mxu0 0
    %295 = vmatprep.subr.bf16.mxu0 0
    %296 = vmatpush1.bf16.msra.mxu0 0
    %297 = vmatprep.subr.bf16.mxu0 0
    %298 = vmatpush1.bf16.msra.mxu0 0
    %299 = vmatprep.subr.bf16.mxu0 0
    %300 = vmatpush1.bf16.msra.mxu0 0
    %301 = vmatprep.subr.bf16.mxu0 0
    %302 = vmatpush1.bf16.msra.mxu0 0
    %303 = vmatprep.subr.bf16.mxu0 0
    %304 = vmatpush1.bf16.msra.mxu0 0
    %305 = vmatprep.mubr.bf16.mxu0 0
    %306 = vmatmul.mubr.bf16.gmra.mrb[0].mxu0 %v271
    %v307 = vpop.f32.mrb[0].mxu0
    %v308 = vadd.f32 0.0, %v307
    %v309 = vpop.f32.mrb[0].mxu0
    %v310 = vpop.f32.mrb[0].mxu0
    %v311 = vpop.f32.mrb[0].mxu0
    %312 = vdwg.mxu0
    %v313 = vadd.f32 %v76, %v308
    %v314 = vmul.f32 %v313, 0.5
    %v316 = vrot.slane %v313, 7
    %v318 = vsel %vm84, %v314, %v316
    %v319 = vtanh.pop %v318
    %v320 = vmul.f32 %v319, 0.5
    %v321 = vadd.f32 %v320, 0.5
    %v322 = vmul.f32 %v321, %v259
    %v324 = vrot.slane %v319, 1
    %325 = vrot.lane.b32.xlu0 %v324, 64
    %v326 = vpop.permute.xlu0 %325
    %v328 = vmul.f32 %v321, %v326
    %330 = vrot.lane.b32.xlu0 %v328, 32
    %v331 = vpop.permute.xlu0 %330
    %v333 = vadd.f32 %v322, %v331
    %v334 = vtanh.pop %v333
    %336 = vrot.lane.b32.xlu0 %v334, 64
    %v337 = vpop.permute.xlu0 %336
    %v339 = vmul.f32 %v321, %v337
    %v340 = vpack.c.bf16 %v339, %v339
    %342 = vrot.lane.b32.xlu0 %v340, 32
    %v343 = vpop.permute.xlu0 %342
    %v345 = vsel %vm117, %v343, 0
    %347 = vmatprep.subr.bf16.mxu0 0
    %348 = vmatpush1.bf16.msra.mxu0 %v113
    %349 = vmatprep.subr.bf16.mxu0 0
    %350 = vmatpush1.bf16.msra.mxu0 %v114
    %351 = vmatprep.subr.bf16.mxu0 0
    %352 = vmatpush1.bf16.msra.mxu0 0
    %353 = vmatprep.subr.bf16.mxu0 0
    %354 = vmatpush1.bf16.msra.mxu0 0
    %355 = vmatprep.subr.bf16.mxu0 0
    %356 = vmatpush1.bf16.msra.mxu0 0
    %357 = vmatprep.subr.bf16.mxu0 0
    %358 = vmatpush1.bf16.msra.mxu0 0
    %359 = vmatprep.subr.bf16.mxu0 0
    %360 = vmatpush1.bf16.msra.mxu0 0
    %361 = vmatprep.subr.bf16.mxu0 0
    %362 = vmatpush1.bf16.msra.mxu0 0
    %363 = vmatprep.subr.bf16.mxu0 0
    %364 = vmatpush1.bf16.msra.mxu0 0
    %365 = vmatprep.subr.bf16.mxu0 0
    %366 = vmatpush1.bf16.msra.mxu0 0
    %367 = vmatprep.subr.bf16.mxu0 0
    %368 = vmatpush1.bf16.msra.mxu0 0
    %369 = vmatprep.subr.bf16.mxu0 0
    %370 = vmatpush1.bf16.msra.mxu0 0
    %371 = vmatprep.subr.bf16.mxu0 0
    %372 = vmatpush1.bf16.msra.mxu0 0
    %373 = vmatprep.subr.bf16.mxu0 0
    %374 = vmatpush1.bf16.msra.mxu0 0
    %375 = vmatprep.subr.bf16.mxu0 0
    %376 = vmatpush1.bf16.msra.mxu0 0
    %377 = vmatprep.subr.bf16.mxu0 0
    %378 = vmatpush1.bf16.msra.mxu0 0
    %379 = vmatprep.mubr.bf16.mxu0 0
    %380 = vmatmul.mubr.bf16.gmra.mrb[0].mxu0 %v345
    %v381 = vpop.f32.mrb[0].mxu0
    %v382 = vadd.f32 0.0, %v381
    %v383 = vpop.f32.mrb[0].mxu0
    %v384 = vpop.f32.mrb[0].mxu0
    %v385 = vpop.f32.mrb[0].mxu0
    %386 = vdwg.mxu0
    %v387 = vadd.f32 %v79, %v382
    %v388 = vmul.f32 %v387, 0.5
    %v390 = vrot.slane %v387, 7
    %v392 = vsel %vm84, %v388, %v390
    %v393 = vtanh.pop %v392
    %v394 = vmul.f32 %v393, 0.5
    %v395 = vadd.f32 %v394, 0.5
    %v396 = vmul.f32 %v395, %v333
    %v398 = vrot.slane %v393, 1
    %399 = vrot.lane.b32.xlu0 %v398, 64
    %v400 = vpop.permute.xlu0 %399
    %v402 = vmul.f32 %v395, %v400
    %404 = vrot.lane.b32.xlu0 %v402, 32
    %v405 = vpop.permute.xlu0 %404
    %v407 = vadd.f32 %v396, %v405
    %v408 = vtanh.pop %v407
    %410 = vrot.lane.b32.xlu0 %v408, 64
    %v411 = vpop.permute.xlu0 %410
    %v413 = vmul.f32 %v395, %v411
    %v415 = vrot.slane %v191, 7
    %v418 = vrot.slane %v265, 6
    %v421 = vrot.slane %v339, 5
    %v424 = vrot.slane %v413, 4
    %v426 = vsel %vm84, %v100, %v415
    %vm427 = vcmask 1041408
    %v428 = vsel %vm427, %v426, %v418
    %vm429 = vcmask 1042432
    %v430 = vsel %vm429, %v428, %v421
    %vm431 = vcmask 1043456
    %v432 = vsel %vm431, %v430, %v424
    %v433 = vpack.c.bf16 %v432, %v432
    %v434 = vlaneseq
    %v435 = vshrl.u32 %v434, 7
    %v436 = vsub.s32 0, %v435
    %v437 = vrot.slane %v64, %v436
    %439 = vrot.lane.b32.xlu0 %v433, 32
    %v440 = vpop.permute.xlu0 %439
    %v445 = vunpack.c.l.b16 %v60
    %v446 = vunpack.c.l.b16 %v61
    %v447 = vunpack.c.l.b16 %v62
    %v448 = vunpack.c.l.b16 %v63
    %v449 = vpack.c.b16 %v446, %v445
    %v450 = vpack.c.b16 %v448, %v447
    %v454 = vsel %vm117, %v440, 0
    %456 = vmatprep.subr.bf16.mxu0 0
    %457 = vmatpush1.bf16.msra.mxu0 %v449
    %458 = vmatprep.subr.bf16.mxu0 0
    %459 = vmatpush1.bf16.msra.mxu0 %v450
    %460 = vmatprep.subr.bf16.mxu0 0
    %461 = vmatpush1.bf16.msra.mxu0 0
    %462 = vmatprep.subr.bf16.mxu0 0
    %463 = vmatpush1.bf16.msra.mxu0 0
    %464 = vmatprep.subr.bf16.mxu0 0
    %465 = vmatpush1.bf16.msra.mxu0 0
    %466 = vmatprep.subr.bf16.mxu0 0
    %467 = vmatpush1.bf16.msra.mxu0 0
    %468 = vmatprep.subr.bf16.mxu0 0
    %469 = vmatpush1.bf16.msra.mxu0 0
    %470 = vmatprep.subr.bf16.mxu0 0
    %471 = vmatpush1.bf16.msra.mxu0 0
    %472 = vmatprep.subr.bf16.mxu0 0
    %473 = vmatpush1.bf16.msra.mxu0 0
    %474 = vmatprep.subr.bf16.mxu0 0
    %475 = vmatpush1.bf16.msra.mxu0 0
    %476 = vmatprep.subr.bf16.mxu0 0
    %477 = vmatpush1.bf16.msra.mxu0 0
    %478 = vmatprep.subr.bf16.mxu0 0
    %479 = vmatpush1.bf16.msra.mxu0 0
    %480 = vmatprep.subr.bf16.mxu0 0
    %481 = vmatpush1.bf16.msra.mxu0 0
    %482 = vmatprep.subr.bf16.mxu0 0
    %483 = vmatpush1.bf16.msra.mxu0 0
    %484 = vmatprep.subr.bf16.mxu0 0
    %485 = vmatpush1.bf16.msra.mxu0 0
    %486 = vmatprep.subr.bf16.mxu0 0
    %487 = vmatpush1.bf16.msra.mxu0 0
    %488 = vmatprep.mubr.bf16.mxu0 0
    %489 = vmatmul.mubr.bf16.gmra.mrb[0].mxu0 %v454
    %v490 = vpop.f32.mrb[0].mxu0
    %v491 = vadd.f32 %v437, %v490
    %v492 = vpop.f32.mrb[0].mxu0
    %v493 = vpop.f32.mrb[0].mxu0
    %v494 = vpop.f32.mrb[0].mxu0
    %495 = vdwg.mxu0
    %496 = vrot.lane.b32.xlu0 %v413, 32
    %v497 = vpop.permute.xlu0 %496
    %v499 = vsel %vm117, %v497, 0.0
    %501 = vrot.lane.b32.xlu0 %v407, 96
    %v502 = vpop.permute.xlu0 %501
    %v504 = vsel %vm117, %v502, 0.0
    %v506 = vrot.slane %v499, 3
    %v509 = vrot.slane %v504, 2
    %vm511 = vcmask 1044480
    %v512 = vsel %vm511, %v491, %v506
    %vm513 = vcmask 1045504
    %v514 = vsel %vm513, %v512, %v509
    %vm515 = vcmask 1046528
    %v516 = vsel %vm515, %v514, 0.0
    %517 = vst [vmem:[%s3] sm:$0xff] %v516
    // Predicated region
    $region26: #{rnn_forward.1} parent=1 // pred_check
      _
    $region27: #{rnn_forward.1} parent=1 // pred_check_branch
      %519 = sbr.rel (0) target = $region29
    $region28: #{rnn_forward.1} parent=1 // pred_region
      _
    $region29: #{rnn_forward.1} parent=1 // pred_fallthru
      _
    // Predicated region
    $region30: #{rnn_forward.1} parent=1 // pred_check
      _
    $region31: #{rnn_forward.1} parent=1 // pred_check_branch
      %521 = sbr.rel (0) target = $region33
    $region32: #{rnn_forward.1} parent=1 // pred_region
      _
    $region33: #{rnn_forward.1} parent=1 // pred_fallthru
      _
    %522 = vsyncpa [#allocation3], 1
    %523 = vsyncpa [#allocation7], 1
    %524 = vsyncpa [#allocation4], 1

</llo_original>
